<compile_context>
chip_gen: v7x
topology: tpu7x:2x2x1
jax: 0.10.0
libtpu: 0.0.40
codegen_flags: <defaults>
</compile_context>

<pallas_src>
import functools

import jax
import jax.numpy as jnp
from jax import lax
from jax.experimental import pallas as pl
from jax.experimental.pallas import tpu as pltpu

_INV_SQRT2 = 0.7071067811865476


def _gelu_exact(x):
    # torch.nn.GELU() default = exact erf formulation.
    return 0.5 * x * (1.0 + lax.erf(x * _INV_SQRT2))


def _round_up(n, m):
    return ((n + m - 1) // m) * m


def _ensemble_kernel(n_mid, x_ref, w1_ref, b1_ref, wf_ref, bf_ref, *refs):
    """One batch tile of the whole forward pass.

      x_ref  : (TB, Din)     native (batch, feature) layout — no wrapper transpose
      w1_ref : (M*Hpre, Din) concatenated pretrained layer-1 weights
      b1_ref : (M*Hpre, 1)   concatenated pretrained layer-1 biases
      wf_ref : (d1, M*Hpre)  pretrained layer-2 fused with head W0
      bf_ref : (d1, 1)       fused bias
      refs   : n_mid middle head weights (d_{i+1}, d_i), W_last (d_out, d_mid),
               out (d_out, TB)

    Activations live in batch-on-lanes layout (features, TB): the large batch
    axis sits on the 128-lane axis, so tanh/sin/erf-GELU are lane-dense and
    the output store is unmasked.  Note: the bottleneck is the VALU/EUP
    transcendental chain, not the tiny MXU matmuls — do not move matmul work
    onto the VPU.
    """
    mid_refs = refs[:n_mid]
    wlast_ref = refs[n_mid]
    o_ref = refs[n_mid + 1]

    # All M pretrained first layers in one MXU pass; the x transpose is folded
    # into the contraction:  (MH, Din) x (TB, Din) contract last dims -> (MH, TB).
    h = jnp.tanh(
        lax.dot_general(
            w1_ref[...],
            x_ref[...],
            dimension_numbers=(((1,), (1,)), ((), ())),
            preferred_element_type=jnp.float32,
        )
        + b1_ref[...]
    )

    # Pretrained output layer fused with the first (bias-free) head linear,
    # followed by Sine.
    t = jnp.sin(
        jnp.dot(wf_ref[...], h, preferred_element_type=jnp.float32) + bf_ref[...]
    )

    # Middle head layers: Linear(bias=False) + exact-erf GELU.
    for i in range(n_mid):
        t = _gelu_exact(
            jnp.dot(mid_refs[i][...], t, preferred_element_type=jnp.float32)
        )

    # Last head layer: plain Linear(bias=False).
    t = jnp.dot(wlast_ref[...], t, preferred_element_type=jnp.float32)
    o_ref[...] = t.astype(o_ref.dtype)


def pack_params(pre_params, lin_weights):
    """One-time wrapper-side weight packing (hoisted out of the hot loop).

    pre_params  = (w1s, b1s, w2s, b2s), stacked over the M-1 *used* models,
                  PyTorch layout: w1s (M,Hpre,Din), w2s (M,D0,Hpre).
    lin_weights = list of PyTorch-layout (out, in) matrices of the head.
    """
    w1s, b1s, w2s, b2s = pre_params
    M, Hpre, Din = w1s.shape

    # Concatenate pretrained layer 1 along the output axis -> (M*Hpre, Din).
    w1_cat = jnp.reshape(w1s, (M * Hpre, Din)).astype(jnp.float32)
    b1_cat = jnp.reshape(b1s, (M * Hpre, 1)).astype(jnp.float32)

    # Concatenate pretrained layer 2 along the contracting axis -> (D0, M*Hpre),
    # sum the output biases.  (Intentional FP-summation reorder vs. reference;
    # verified within 1e-4.)
    w2_cat = jnp.concatenate([w2s[m] for m in range(M)], axis=1).astype(jnp.float32)
    b2_sum = jnp.sum(b2s, axis=0).astype(jnp.float32)          # (D0,)

    # Fuse pretrained layer 2 with the first bias-free head linear W0 (d1, D0).
    w0 = lin_weights[0].astype(jnp.float32)
    wf = w0 @ w2_cat                                           # (d1, M*Hpre)
    bf = (w0 @ b2_sum)[:, None]                                # (d1, 1)

    mids = [w.astype(jnp.float32) for w in lin_weights[1:-1]]  # (d_{i+1}, d_i)
    wlast = lin_weights[-1].astype(jnp.float32)                # (d_out, d_mid)

    return {"W1": w1_cat, "b1": b1_cat, "Wf": wf, "bf": bf,
            "mids": mids, "Wlast": wlast}


def _pick_tile(B, tile_b):
    """Largest batch tile <= tile_b, preferring a multiple of 128 that divides
    B exactly so the last grid step runs at full lane occupancy."""
    if B <= tile_b:
        return B
    cand = (tile_b // 128) * 128
    while cand >= 128:
        if B % cand == 0:
            return cand
        cand -= 128
    # No divisor found: ragged last tile (masked store, no cross-lane
    # reductions in the kernel, so padding lanes are harmless).
    return max((tile_b // 128) * 128, 128)


def pretrained_ensemble_forward(x, packed, *, tile_b=4096):
    """Launch the Pallas kernel on a batch-tiled 1-D grid.

    x      : (B, Din) f32, native layout — no wrapper-side transpose of x.
    packed : output of pack_params()
    tile_b : max batch tile.  4K-16K amortizes the ~0.35 us/step pipeline
             overhead and keeps DMA segments HBM-efficient; the live VMEM
             footprint stays MiB-scale.  On v7x pick tile_b so that
             cdiv(B, TB) >= 2 to keep both TensorCores busy.
    """
    B, Din = x.shape
    MH = packed["W1"].shape[0]
    d1 = packed["Wf"].shape[0]
    d_out = packed["Wlast"].shape[0]
    n_mid = len(packed["mids"])

    TB = _pick_tile(B, tile_b)
    grid = (pl.cdiv(B, TB),)

    weight_args = [packed["W1"], packed["b1"], packed["Wf"], packed["bf"],
                   *packed["mids"], packed["Wlast"]]
    # Weights: full-array blocks, resident across all grid iterations.
    weight_specs = [pl.BlockSpec(w.shape, lambda i: (0, 0)) for w in weight_args]

    # Rough VMEM footprint: x + out double-buffered, two widest activation
    # slabs, plus weights — padded to the (8, 128) VMEM tiling.
    widths = [MH, d1] + [int(m.shape[0]) for m in packed["mids"]] + [d_out]
    vmem_est = 4 * (
        2 * _round_up(TB, 8) * _round_up(Din, 128)              # x blocks
        + 2 * _round_up(d_out, 8) * _round_up(TB, 128)          # out blocks
        + 2 * _round_up(max(widths), 8) * _round_up(TB, 128)    # activations
        + sum(int(w.size) for w in weight_args)
    )
    # Headroom for compiler temporaries; matters on v5e (16 MiB default scoped
    # VMEM) once TB is raised.  Capped at 48 MiB to stay safe on v7x (64 MiB).
    vmem_limit = int(min(48 * 2**20, max(32 * 2**20, 2 * vmem_est)))

    flops = 2 * B * (
        Din * MH + MH * d1
        + sum(int(w.shape[0]) * int(w.shape[1]) for w in packed["mids"])
        + int(packed["Wlast"].shape[0]) * int(packed["Wlast"].shape[1])
    )
    transcendentals = B * (MH + d1 + sum(int(w.shape[0]) for w in packed["mids"]))
    bytes_accessed = 4 * (B * (Din + d_out) + sum(int(w.size) for w in weight_args))

    kernel = functools.partial(_ensemble_kernel, n_mid)
    out_t = pl.pallas_call(
        kernel,
        out_shape=jax.ShapeDtypeStruct((d_out, B), jnp.float32),
        grid=grid,
        in_specs=[pl.BlockSpec((TB, Din), lambda i: (i, 0))] + weight_specs,
        out_specs=pl.BlockSpec((d_out, TB), lambda i: (0, i)),
        compiler_params=pltpu.CompilerParams(
            # NOTE(v7x): if a trace shows one TensorCore idle, switch this
            # axis to pltpu.CORE_PARALLEL; "parallel" is already correct and
            # costs nothing on single-TC v5e/v6e.
            dimension_semantics=("parallel",),
            vmem_limit_bytes=vmem_limit,
        ),
        cost_estimate=pl.CostEstimate(
            flops=flops,
            transcendentals=transcendentals,
            bytes_accessed=bytes_accessed,
        ),
    )(x.astype(jnp.float32), *weight_args)

    # Tiny (d_out, B) -> (B, d_out) transpose stays in the wrapper.
    return jnp.transpose(out_t)


def _reference_forward(x, pre_params, lin_weights):
    """Plain-JAX reference mirroring the PyTorch module (no fusion)."""
    w1s, b1s, w2s, b2s = pre_params
    pred = 0.0
    for m in range(w1s.shape[0]):
        h = jnp.tanh(x @ w1s[m].T + b1s[m])
        pred = pred + (h @ w2s[m].T + b2s[m])
    t = pred
    n = len(lin_weights)
    for i, w in enumerate(lin_weights):
        t = t @ w.T
        if i == 0:
            t = jnp.sin(t)
        elif i < n - 1:
            t = _gelu_exact(t)
    return t


if __name__ == "__main__":
    key = jax.random.PRNGKey(0)

    # --- configuration (small, consistent with the module's __init__) ------
    batch = 8
    x_dim = 3                    # raw PDE coordinate dimension
    pre_hidden = 16              # hidden width of each synthetic pretrained MLP
    layers_all = [4, 32, 32, 2]  # ensemble head: in=4 (== pretrained out), out=2
    num_pretrained = 3           # forward uses pretrained_models[:-1] -> 2 models

    n_used = num_pretrained - 1
    d0 = layers_all[0]

    # --- deterministic synthetic parameters --------------------------------
    ks = jax.random.split(key, 16)
    scale = 0.2
    x = jax.random.normal(ks[0], (batch, x_dim), jnp.float32)

    # TODO(synk): pretrained_models are arbitrary nn.Modules in the spec;
    # synthesized here as small tanh MLPs with output dim == layers_all[0].
    w1s = scale * jax.random.normal(ks[1], (n_used, pre_hidden, x_dim), jnp.float32)
    b1s = scale * jax.random.normal(ks[2], (n_used, pre_hidden), jnp.float32)
    w2s = scale * jax.random.normal(ks[3], (n_used, d0, pre_hidden), jnp.float32)
    b2s = scale * jax.random.normal(ks[4], (n_used, d0), jnp.float32)
    pre_params = (w1s, b1s, w2s, b2s)

    # ensemble head linears (bias=False, PyTorch (out, in) layout)
    hidden = layers_all[1:-1]
    dims = [layers_all[0]] + hidden + [layers_all[-1]]
    lin_weights = []
    for i, (din, dout) in enumerate(zip(dims[:-1], dims[1:])):
        lin_weights.append(
            scale * jax.random.normal(ks[5 + i], (dout, din), jnp.float32)
        )

    # --- pack once (hot-loop friendly), run kernel, verify ------------------
    packed = pack_params(pre_params, lin_weights)
    out = pretrained_ensemble_forward(x, packed)
    out = jax.block_until_ready(out)

    ref = _reference_forward(x, pre_params, lin_weights)
    assert out.shape == (batch, layers_all[-1]), out.shape
    assert jnp.allclose(out, ref, rtol=1e-4, atol=1e-4), (
        float(jnp.max(jnp.abs(out - ref)))
    )

    print("KERNEL_OK")
</pallas_src>

<mosaic_0001>
module attributes {stable_mosaic.version = 11 : i64} {
  func.func @_ensemble_kernel(%arg0: i32, %arg1: memref<8x3xf32, #tpu.memory_space<vmem>>, %arg2: memref<32x3xf32, #tpu.memory_space<vmem>>, %arg3: memref<32x1xf32, #tpu.memory_space<vmem>>, %arg4: memref<32x32xf32, #tpu.memory_space<vmem>>, %arg5: memref<32x1xf32, #tpu.memory_space<vmem>>, %arg6: memref<32x32xf32, #tpu.memory_space<vmem>>, %arg7: memref<2x32xf32, #tpu.memory_space<vmem>>, %arg8: memref<2x8xf32, #tpu.memory_space<vmem>>) attributes {dimension_semantics = [#tpu.dimension_semantics<parallel>], iteration_bounds = array<i64: 1>, scalar_prefetch = 0 : i64, scratch_operands = 0 : i64, tpu.core_type = #tpu.core_type<tc>, window_params = [{transform_indices = @transform_0, window_bounds = array<i64: 8, 3>}, {pipeline_mode = #tpu.pipeline_mode<synchronous>, transform_indices = @transform_1, window_bounds = array<i64: 32, 3>}, {pipeline_mode = #tpu.pipeline_mode<synchronous>, transform_indices = @transform_2, window_bounds = array<i64: 32, 1>}, {pipeline_mode = #tpu.pipeline_mode<synchronous>, transform_indices = @transform_3, window_bounds = array<i64: 32, 32>}, {pipeline_mode = #tpu.pipeline_mode<synchronous>, transform_indices = @transform_4, window_bounds = array<i64: 32, 1>}, {pipeline_mode = #tpu.pipeline_mode<synchronous>, transform_indices = @transform_5, window_bounds = array<i64: 32, 32>}, {pipeline_mode = #tpu.pipeline_mode<synchronous>, transform_indices = @transform_6, window_bounds = array<i64: 2, 32>}, {transform_indices = @transform_7, window_bounds = array<i64: 2, 8>}]} {
    %c0 = arith.constant 0 : index
    %c0_0 = arith.constant 0 : index
    %0 = vector.load %arg2[%c0, %c0_0] : memref<32x3xf32, #tpu.memory_space<vmem>>, vector<32x3xf32>
    %c0_1 = arith.constant 0 : index
    %c0_2 = arith.constant 0 : index
    %1 = vector.load %arg1[%c0_1, %c0_2] : memref<8x3xf32, #tpu.memory_space<vmem>>, vector<8x3xf32>
    %cst = arith.constant dense<0.000000e+00> : vector<32x8xf32>
    %2 = tpu.matmul %0, %1, %cst {dimension_numbers = #tpu.dot_dimension_numbers<[1], [1], [0], [0], [0, 0, 1, 0], [], []>} : vector<32x3xf32>, vector<8x3xf32>, vector<32x8xf32> -> vector<32x8xf32>
    %c0_3 = arith.constant 0 : index
    %c0_4 = arith.constant 0 : index
    %3 = vector.load %arg3[%c0_3, %c0_4] : memref<32x1xf32, #tpu.memory_space<vmem>>, vector<32x1xf32>
    %4 = vector.broadcast %3 : vector<32x1xf32> to vector<32x8xf32>
    %5 = arith.addf %2, %4 : vector<32x8xf32>
    %6 = math.tanh %5 : vector<32x8xf32>
    %c0_5 = arith.constant 0 : index
    %c0_6 = arith.constant 0 : index
    %7 = vector.load %arg4[%c0_5, %c0_6] : memref<32x32xf32, #tpu.memory_space<vmem>>, vector<32x32xf32>
    %cst_7 = arith.constant dense<0.000000e+00> : vector<32x8xf32>
    %8 = tpu.matmul %7, %6, %cst_7 {dimension_numbers = #tpu.dot_dimension_numbers<[1], [0], [0], [1], [0, 0, 1, 1], [], []>} : vector<32x32xf32>, vector<32x8xf32>, vector<32x8xf32> -> vector<32x8xf32>
    %c0_8 = arith.constant 0 : index
    %c0_9 = arith.constant 0 : index
    %9 = vector.load %arg5[%c0_8, %c0_9] : memref<32x1xf32, #tpu.memory_space<vmem>>, vector<32x1xf32>
    %10 = vector.broadcast %9 : vector<32x1xf32> to vector<32x8xf32>
    %11 = arith.addf %8, %10 : vector<32x8xf32>
    %12 = math.sin %11 : vector<32x8xf32>
    %c0_10 = arith.constant 0 : index
    %c0_11 = arith.constant 0 : index
    %13 = vector.load %arg6[%c0_10, %c0_11] : memref<32x32xf32, #tpu.memory_space<vmem>>, vector<32x32xf32>
    %cst_12 = arith.constant dense<0.000000e+00> : vector<32x8xf32>
    %14 = tpu.matmul %13, %12, %cst_12 {dimension_numbers = #tpu.dot_dimension_numbers<[1], [0], [0], [1], [0, 0, 1, 1], [], []>} : vector<32x32xf32>, vector<32x8xf32>, vector<32x8xf32> -> vector<32x8xf32>
    %cst_13 = arith.constant 5.000000e-01 : f32
    %15 = vector.broadcast %cst_13 : f32 to vector<32x8xf32>
    %16 = arith.mulf %15, %14 : vector<32x8xf32>
    %cst_14 = arith.constant 0.707106769 : f32
    %17 = vector.broadcast %cst_14 : f32 to vector<32x8xf32>
    %18 = arith.mulf %14, %17 : vector<32x8xf32>
    %19 = math.erf %18 : vector<32x8xf32>
    %cst_15 = arith.constant 1.000000e+00 : f32
    %20 = vector.broadcast %cst_15 : f32 to vector<32x8xf32>
    %21 = arith.addf %20, %19 : vector<32x8xf32>
    %22 = arith.mulf %16, %21 : vector<32x8xf32>
    %c0_16 = arith.constant 0 : index
    %c0_17 = arith.constant 0 : index
    %23 = vector.load %arg7[%c0_16, %c0_17] : memref<2x32xf32, #tpu.memory_space<vmem>>, vector<2x32xf32>
    %cst_18 = arith.constant dense<0.000000e+00> : vector<2x8xf32>
    %24 = tpu.matmul %23, %22, %cst_18 {dimension_numbers = #tpu.dot_dimension_numbers<[1], [0], [0], [1], [0, 0, 1, 1], [], []>} : vector<2x32xf32>, vector<32x8xf32>, vector<2x8xf32> -> vector<2x8xf32>
    %c0_19 = arith.constant 0 : index
    %c0_20 = arith.constant 0 : index
    %25 = vector.load %arg8[%c0_19, %c0_20] : memref<2x8xf32, #tpu.memory_space<vmem>>, vector<2x8xf32>
    tpu.vector_store %arg8[%c0_19, %c0_20], %24 {strides = array<i32>} : memref<2x8xf32, #tpu.memory_space<vmem>>, vector<2x8xf32>,
    return
  }
  func.func @transform_0(%arg0: i32) -> (i32, i32) {
    %c0_i32 = arith.constant 0 : i32
    %c0_i32_0 = arith.constant 0 : i32
    return %arg0, %c0_i32 : i32, i32
  }
  func.func @transform_1(%arg0: i32) -> (i32, i32) {
    %c0_i32 = arith.constant 0 : i32
    %c0_i32_0 = arith.constant 0 : i32
    %c0_i32_1 = arith.constant 0 : i32
    return %c0_i32, %c0_i32_0 : i32, i32
  }
  func.func @transform_2(%arg0: i32) -> (i32, i32) {
    %c0_i32 = arith.constant 0 : i32
    %c0_i32_0 = arith.constant 0 : i32
    %c0_i32_1 = arith.constant 0 : i32
    return %c0_i32, %c0_i32_0 : i32, i32
  }
  func.func @transform_3(%arg0: i32) -> (i32, i32) {
    %c0_i32 = arith.constant 0 : i32
    %c0_i32_0 = arith.constant 0 : i32
    %c0_i32_1 = arith.constant 0 : i32
    return %c0_i32, %c0_i32_0 : i32, i32
  }
  func.func @transform_4(%arg0: i32) -> (i32, i32) {
    %c0_i32 = arith.constant 0 : i32
    %c0_i32_0 = arith.constant 0 : i32
    %c0_i32_1 = arith.constant 0 : i32
    return %c0_i32, %c0_i32_0 : i32, i32
  }
  func.func @transform_5(%arg0: i32) -> (i32, i32) {
    %c0_i32 = arith.constant 0 : i32
    %c0_i32_0 = arith.constant 0 : i32
    %c0_i32_1 = arith.constant 0 : i32
    return %c0_i32, %c0_i32_0 : i32, i32
  }
  func.func @transform_6(%arg0: i32) -> (i32, i32) {
    %c0_i32 = arith.constant 0 : i32
    %c0_i32_0 = arith.constant 0 : i32
    %c0_i32_1 = arith.constant 0 : i32
    return %c0_i32, %c0_i32_0 : i32, i32
  }
  func.func @transform_7(%arg0: i32) -> (i32, i32) {
    %c0_i32 = arith.constant 0 : i32
    %c0_i32_0 = arith.constant 0 : i32
    return %c0_i32, %arg0 : i32, i32
  }
}

</mosaic_0001>

<llo_original>
// kernel: tpu_custom_call.1
$region0: #{tpu_custom_call.1}
  #allocation0 [shape = 'u32[]', space=smem, size = 0x4, offset = 0x4, fixed_abs, tag = 'smem constant byte address 0x4 - core index']
  #allocation1 [shape = 'u32[144,128]{1,0:T(1,128)}', space=vmem, size = 0x12000, scoped, tag = 'internal scratch']
  %s0 = inlined_call_operand.vmem [shape: f32[8,3], index: 0, kind: input, shape index: {}]
  %s1 = inlined_call_operand.vmem [shape: f32[32,3], index: 1, kind: input, shape index: {}]
  %s2 = inlined_call_operand.vmem [shape: f32[32,1], index: 2, kind: input, shape index: {}]
  %s3 = inlined_call_operand.vmem [shape: f32[32,32], index: 3, kind: input, shape index: {}]
  %s4 = inlined_call_operand.vmem [shape: f32[32,1], index: 4, kind: input, shape index: {}]
  %s5 = inlined_call_operand.vmem [shape: f32[32,32], index: 5, kind: input, shape index: {}]
  %s6 = inlined_call_operand.vmem [shape: f32[2,32], index: 6, kind: input, shape index: {}]
  %s7 = inlined_call_operand.hbm [shape: f32[2,8], index: 7, kind: output, shape index: {}]
  %s8 = sld [smem:[#allocation0]]
  $region38: #{tpu_custom_call.1} parent=0
    _
  %s10 = ssub.s32 1, %s8
  %s11 = scalar_select 0, %s10, %s8
  $region1: #{tpu_custom_call.1} parent=0
    #allocation2 [shape = 'u8[1024]{0}', space=vmem, size = 0x400, scoped, tag = 'output window, operand 0, single buffered']
    #allocation3 [shape = 's32[1]{0}', space=sflag, size = 0x4, scoped, tag = 'scoped memory for tpu_custom_call.1']
    %12 = vsyncpa [#allocation3], 0
    // Predicated region
    $region2: #{tpu_custom_call.1} parent=1 // pred_check
      _
    $region3: #{tpu_custom_call.1} parent=1 // pred_check_branch
      %14 = sbr.rel (0) target = $region5
    $region4: #{tpu_custom_call.1} parent=1 // pred_region
      _
    $region5: #{tpu_custom_call.1} parent=1 // pred_fallthru
      _
    // Predicated region
    $region6: #{tpu_custom_call.1} parent=1 // pred_check
      _
    $region7: #{tpu_custom_call.1} parent=1 // pred_check_branch
      %16 = sbr.rel (0) target = $region9
    $region8: #{tpu_custom_call.1} parent=1 // pred_region
      _
    $region9: #{tpu_custom_call.1} parent=1 // pred_fallthru
      _
    // Predicated region
    $region10: #{tpu_custom_call.1} parent=1 // pred_check
      _
    $region11: #{tpu_custom_call.1} parent=1 // pred_check_branch
      %18 = sbr.rel (0) target = $region13
    $region12: #{tpu_custom_call.1} parent=1 // pred_region
      _
    $region13: #{tpu_custom_call.1} parent=1 // pred_fallthru
      _
    // Predicated region
    $region14: #{tpu_custom_call.1} parent=1 // pred_check
      _
    $region15: #{tpu_custom_call.1} parent=1 // pred_check_branch
      %20 = sbr.rel (0) target = $region17
    $region16: #{tpu_custom_call.1} parent=1 // pred_region
      _
    $region17: #{tpu_custom_call.1} parent=1 // pred_fallthru
      _
    // Predicated region
    $region18: #{tpu_custom_call.1} parent=1 // pred_check
      _
    $region19: #{tpu_custom_call.1} parent=1 // pred_check_branch
      %22 = sbr.rel (0) target = $region21
    $region20: #{tpu_custom_call.1} parent=1 // pred_region
      _
    $region21: #{tpu_custom_call.1} parent=1 // pred_fallthru
      _
    // Predicated region
    $region22: #{tpu_custom_call.1} parent=1 // pred_check
      _
    $region23: #{tpu_custom_call.1} parent=1 // pred_check_branch
      %24 = sbr.rel (0) target = $region25
    $region24: #{tpu_custom_call.1} parent=1 // pred_region
      _
    $region25: #{tpu_custom_call.1} parent=1 // pred_fallthru
      _
    // Predicated region
    $region26: #{tpu_custom_call.1} parent=1 // pred_check
      _
    $region27: #{tpu_custom_call.1} parent=1 // pred_check_branch
      %26 = sbr.rel (0) target = $region29
    $region28: #{tpu_custom_call.1} parent=1 // pred_region
      _
    $region29: #{tpu_custom_call.1} parent=1 // pred_fallthru
      _
    %v27 = vld [vmem:[%s1] sm:$0xff]
    %v28 = vld [vmem:[%s1 + $0x8] sm:$0xff]
    %v29 = vld [vmem:[%s1 + $0x10] sm:$0xff]
    %v30 = vld [vmem:[%s1 + $0x18] sm:$0xff]
    %v31 = vld [vmem:[%s0] sm:$0xff]
    %v32 = vld [vmem:[%s2] sm:$0xff]
    %v33 = vld [vmem:[%s2 + $0x8] sm:$0xff]
    %v34 = vld [vmem:[%s2 + $0x10] sm:$0xff]
    %v35 = vld [vmem:[%s2 + $0x18] sm:$0xff]
    %37 = vset.pattern.permute.xlu0 0
    %38 = vperm.xlu0 %37, %v32
    %v39 = vpop.permute.xlu0 %38
    %42 = vset.pattern.permute.xlu0 0
    %43 = vperm.xlu0 %42, %v33
    %v44 = vpop.permute.xlu0 %43
    %47 = vset.pattern.permute.xlu0 0
    %48 = vperm.xlu0 %47, %v34
    %v49 = vpop.permute.xlu0 %48
    %52 = vset.pattern.permute.xlu0 0
    %53 = vperm.xlu0 %52, %v35
    %v54 = vpop.permute.xlu0 %53
    %vm56 = vcmask 23552
    %v58 = vsel %vm56, %v27, 0
    %v61 = vsel %vm56, %v28, 0
    %v64 = vsel %vm56, %v29, 0
    %v67 = vsel %vm56, %v30, 0
    %v70 = vsel %vm56, %v31, 0
    %72 = vmatprep.subr.mxu0 0.0
    %73 = vmatpush1.xpose.msra.mxu0 %v70
    %74 = vmatprep.subr.mxu0 0.0
    %75 = vmatpush1.xpose.msra.mxu0 0.0
    %76 = vmatprep.subr.mxu0 0.0
    %77 = vmatpush1.xpose.msra.mxu0 0.0
    %78 = vmatprep.subr.mxu0 0.0
    %79 = vmatpush1.xpose.msra.mxu0 0.0
    %80 = vmatprep.subr.mxu0 0.0
    %81 = vmatpush1.xpose.msra.mxu0 0.0
    %82 = vmatprep.subr.mxu0 0.0
    %83 = vmatpush1.xpose.msra.mxu0 0.0
    %84 = vmatprep.subr.mxu0 0.0
    %85 = vmatpush1.xpose.msra.mxu0 0.0
    %86 = vmatprep.subr.mxu0 0.0
    %87 = vmatpush1.xpose.msra.mxu0 0.0
    %88 = vmatprep.subr.mxu0 0.0
    %89 = vmatpush1.xpose.msra.mxu0 0.0
    %90 = vmatprep.subr.mxu0 0.0
    %91 = vmatpush1.xpose.msra.mxu0 0.0
    %92 = vmatprep.subr.mxu0 0.0
    %93 = vmatpush1.xpose.msra.mxu0 0.0
    %94 = vmatprep.subr.mxu0 0.0
    %95 = vmatpush1.xpose.msra.mxu0 0.0
    %96 = vmatprep.subr.mxu0 0.0
    %97 = vmatpush1.xpose.msra.mxu0 0.0
    %98 = vmatprep.subr.mxu0 0.0
    %99 = vmatpush1.xpose.msra.mxu0 0.0
    %100 = vmatprep.subr.mxu0 0.0
    %101 = vmatpush1.xpose.msra.mxu0 0.0
    %102 = vmatprep.subr.mxu0 0.0
    %103 = vmatpush1.xpose.msra.mxu0 0.0
    %104 = vmatprep.subr.mxu0 0.0
    %105 = vmatpush1.xpose.msra.mxu0 0.0
    %106 = vmatprep.subr.mxu0 0.0
    %107 = vmatpush1.xpose.msra.mxu0 0.0
    %108 = vmatprep.subr.mxu0 0.0
    %109 = vmatpush1.xpose.msra.mxu0 0.0
    %110 = vmatprep.subr.mxu0 0.0
    %111 = vmatpush1.xpose.msra.mxu0 0.0
    %112 = vmatprep.subr.mxu0 0.0
    %113 = vmatpush1.xpose.msra.mxu0 0.0
    %114 = vmatprep.subr.mxu0 0.0
    %115 = vmatpush1.xpose.msra.mxu0 0.0
    %116 = vmatprep.subr.mxu0 0.0
    %117 = vmatpush1.xpose.msra.mxu0 0.0
    %118 = vmatprep.subr.mxu0 0.0
    %119 = vmatpush1.xpose.msra.mxu0 0.0
    %120 = vmatprep.subr.mxu0 0.0
    %121 = vmatpush1.xpose.msra.mxu0 0.0
    %122 = vmatprep.subr.mxu0 0.0
    %123 = vmatpush1.xpose.msra.mxu0 0.0
    %124 = vmatprep.subr.mxu0 0.0
    %125 = vmatpush1.xpose.msra.mxu0 0.0
    %126 = vmatprep.subr.mxu0 0.0
    %127 = vmatpush1.xpose.msra.mxu0 0.0
    %128 = vmatprep.subr.mxu0 0.0
    %129 = vmatpush1.xpose.msra.mxu0 0.0
    %130 = vmatprep.subr.mxu0 0.0
    %131 = vmatpush1.xpose.msra.mxu0 0.0
    %132 = vmatprep.subr.mxu0 0.0
    %133 = vmatpush1.xpose.msra.mxu0 0.0
    %134 = vmatprep.subr.mxu0 0.0
    %135 = vmatpush1.xpose.msra.mxu0 0.0
    %136 = vmatprep.mubr.f32.mxu0 0.0
    %137 = vmatmul.mubr.f32.gmra.mrb[0].mxu0 %v58
    %v138 = vpop.f32.mrb[0].mxu0
    %v139 = vadd.f32 %v39, %v138
    %v140 = vpop.f32.mrb[0].mxu0
    %141 = vmatprep.mubr.f32.mxu0 0.0
    %142 = vmatmul.mubr.f32.gmra.mrb[0].mxu0 %v61
    %v143 = vpop.f32.mrb[0].mxu0
    %v144 = vadd.f32 %v44, %v143
    %v145 = vpop.f32.mrb[0].mxu0
    %146 = vmatprep.mubr.f32.mxu0 0.0
    %147 = vmatmul.mubr.f32.gmra.mrb[0].mxu0 %v64
    %v148 = vpop.f32.mrb[0].mxu0
    %v149 = vadd.f32 %v49, %v148
    %v150 = vpop.f32.mrb[0].mxu0
    %151 = vmatprep.mubr.f32.mxu0 0.0
    %152 = vmatmul.mubr.f32.gmra.mrb[0].mxu0 %v67
    %v153 = vpop.f32.mrb[0].mxu0
    %v154 = vadd.f32 %v54, %v153
    %v155 = vpop.f32.mrb[0].mxu0
    %156 = vdwg.mxu0
    %v157 = vtanh.pop %v139
    %v158 = vtanh.pop %v144
    %v159 = vtanh.pop %v149
    %v160 = vtanh.pop %v154
    %v161 = vld [vmem:[%s3] sm:$0xff]
    %v162 = vld [vmem:[%s3 + $0x8] sm:$0xff]
    %v163 = vld [vmem:[%s3 + $0x10] sm:$0xff]
    %v164 = vld [vmem:[%s3 + $0x18] sm:$0xff]
    %v165 = vld [vmem:[%s4] sm:$0xff]
    %v166 = vld [vmem:[%s4 + $0x8] sm:$0xff]
    %v167 = vld [vmem:[%s4 + $0x10] sm:$0xff]
    %v168 = vld [vmem:[%s4 + $0x18] sm:$0xff]
    %170 = vset.pattern.permute.xlu0 0
    %171 = vperm.xlu0 %170, %v165
    %v172 = vpop.permute.xlu0 %171
    %175 = vset.pattern.permute.xlu0 0
    %176 = vperm.xlu0 %175, %v166
    %v177 = vpop.permute.xlu0 %176
    %180 = vset.pattern.permute.xlu0 0
    %181 = vperm.xlu0 %180, %v167
    %v182 = vpop.permute.xlu0 %181
    %185 = vset.pattern.permute.xlu0 0
    %186 = vperm.xlu0 %185, %v168
    %v187 = vpop.permute.xlu0 %186
    %vm189 = vcmask 261120
    %v191 = vsel %vm189, %v161, 0
    %v194 = vsel %vm189, %v162, 0
    %v197 = vsel %vm189, %v163, 0
    %v200 = vsel %vm189, %v164, 0
    %202 = vmatprep.subr.mxu0 0.0
    %203 = vmatpush1.msra.mxu0 %v157
    %204 = vmatprep.subr.mxu0 0.0
    %205 = vmatpush1.msra.mxu0 %v158
    %206 = vmatprep.subr.mxu0 0.0
    %207 = vmatpush1.msra.mxu0 %v159
    %208 = vmatprep.subr.mxu0 0.0
    %209 = vmatpush1.msra.mxu0 %v160
    %210 = vmatprep.subr.mxu0 0.0
    %211 = vmatpush1.msra.mxu0 0.0
    %212 = vmatprep.subr.mxu0 0.0
    %213 = vmatpush1.msra.mxu0 0.0
    %214 = vmatprep.subr.mxu0 0.0
    %215 = vmatpush1.msra.mxu0 0.0
    %216 = vmatprep.subr.mxu0 0.0
    %217 = vmatpush1.msra.mxu0 0.0
    %218 = vmatprep.subr.mxu0 0.0
    %219 = vmatpush1.msra.mxu0 0.0
    %220 = vmatprep.subr.mxu0 0.0
    %221 = vmatpush1.msra.mxu0 0.0
    %222 = vmatprep.subr.mxu0 0.0
    %223 = vmatpush1.msra.mxu0 0.0
    %224 = vmatprep.subr.mxu0 0.0
    %225 = vmatpush1.msra.mxu0 0.0
    %226 = vmatprep.subr.mxu0 0.0
    %227 = vmatpush1.msra.mxu0 0.0
    %228 = vmatprep.subr.mxu0 0.0
    %229 = vmatpush1.msra.mxu0 0.0
    %230 = vmatprep.subr.mxu0 0.0
    %231 = vmatpush1.msra.mxu0 0.0
    %232 = vmatprep.subr.mxu0 0.0
    %233 = vmatpush1.msra.mxu0 0.0
    %234 = vmatprep.subr.mxu0 0.0
    %235 = vmatpush1.msra.mxu0 0.0
    %236 = vmatprep.subr.mxu0 0.0
    %237 = vmatpush1.msra.mxu0 0.0
    %238 = vmatprep.subr.mxu0 0.0
    %239 = vmatpush1.msra.mxu0 0.0
    %240 = vmatprep.subr.mxu0 0.0
    %241 = vmatpush1.msra.mxu0 0.0
    %242 = vmatprep.subr.mxu0 0.0
    %243 = vmatpush1.msra.mxu0 0.0
    %244 = vmatprep.subr.mxu0 0.0
    %245 = vmatpush1.msra.mxu0 0.0
    %246 = vmatprep.subr.mxu0 0.0
    %247 = vmatpush1.msra.mxu0 0.0
    %248 = vmatprep.subr.mxu0 0.0
    %249 = vmatpush1.msra.mxu0 0.0
    %250 = vmatprep.subr.mxu0 0.0
    %251 = vmatpush1.msra.mxu0 0.0
    %252 = vmatprep.subr.mxu0 0.0
    %253 = vmatpush1.msra.mxu0 0.0
    %254 = vmatprep.subr.mxu0 0.0
    %255 = vmatpush1.msra.mxu0 0.0
    %256 = vmatprep.subr.mxu0 0.0
    %257 = vmatpush1.msra.mxu0 0.0
    %258 = vmatprep.subr.mxu0 0.0
    %259 = vmatpush1.msra.mxu0 0.0
    %260 = vmatprep.subr.mxu0 0.0
    %261 = vmatpush1.msra.mxu0 0.0
    %262 = vmatprep.subr.mxu0 0.0
    %263 = vmatpush1.msra.mxu0 0.0
    %264 = vmatprep.subr.mxu0 0.0
    %265 = vmatpush1.msra.mxu0 0.0
    %266 = vmatprep.mubr.f32.mxu0 0.0
    %267 = vmatmul.mubr.f32.gmra.mrb[0].mxu0 %v191
    %v268 = vpop.f32.mrb[0].mxu0
    %v269 = vadd.f32 %v172, %v268
    %v270 = vpop.f32.mrb[0].mxu0
    %271 = vmatprep.mubr.f32.mxu0 0.0
    %272 = vmatmul.mubr.f32.gmra.mrb[0].mxu0 %v194
    %v273 = vpop.f32.mrb[0].mxu0
    %v274 = vadd.f32 %v177, %v273
    %v275 = vpop.f32.mrb[0].mxu0
    %276 = vmatprep.mubr.f32.mxu0 0.0
    %277 = vmatmul.mubr.f32.gmra.mrb[0].mxu0 %v197
    %v278 = vpop.f32.mrb[0].mxu0
    %v279 = vadd.f32 %v182, %v278
    %v280 = vpop.f32.mrb[0].mxu0
    %281 = vmatprep.mubr.f32.mxu0 0.0
    %282 = vmatmul.mubr.f32.gmra.mrb[0].mxu0 %v200
    %v283 = vpop.f32.mrb[0].mxu0
    %v284 = vadd.f32 %v187, %v283
    %v285 = vpop.f32.mrb[0].mxu0
    %286 = vdwg.mxu0
    %v287 = vand.u32 2147483647, %v269
    %vm288 = vcmp.le.f32.partialorder %v287, 0.7853982
    %vm289 = vcmp.lt.s32.totalorder %v269, 0
    %v290 = vand.u32 %v269, 2139095040
    %v291 = vshrl.u32 %v290, 23
    %v292 = vsub.s32 %v291, 127
    %v293 = vand.u32 2147483647, %v269
    %v294 = vand.u32 %v293, 8388607
    %v295 = vor.u32 %v294, 8388608
    %v296 = vsub.s32 0, %v295
    %v297 = vadd.s32 %v292, 1
    %vm298 = vcmp.gt.s32.totalorder %v297, 0
    %v299 = vsel %vm298, %v297, 0
    %v300 = vshrl.u32 %v299, 5
    %v301 = vand.u32 %v299, 31
    %v302 = vsub.s32 32, %v301
    %v303 = vshrl.u32 683565275, %v302
    %v304 = vshll.u32 683565275, %v301
    %v305 = vshrl.u32 2475754826, %v302
    %v306 = vor.u32 %v304, %v305
    %v307 = vshll.u32 2475754826, %v301
    %v308 = vshrl.u32 2131351028, %v302
    %v309 = vor.u32 %v307, %v308
    %v310 = vshll.u32 2131351028, %v301
    %v311 = vshrl.u32 2102212464, %v302
    %v312 = vor.u32 %v310, %v311
    %v313 = vshll.u32 2102212464, %v301
    %v314 = vshrl.u32 920167782, %v302
    %v315 = vor.u32 %v313, %v314
    %v316 = vshll.u32 920167782, %v301
    %v317 = vshrl.u32 1326507024, %v302
    %v318 = vor.u32 %v316, %v317
    %vm319 = vcmp.lt.s32.totalorder %v300, 1
    %vm320 = vcmp.lt.s32.totalorder %v300, 2
    %vm321 = vcmp.lt.s32.totalorder %v300, 3
    %vm322 = vcmp.lt.s32.totalorder %v300, 4
    %v323 = vsel %vm319, %v303, %v306
    %v324 = vsel %vm322, %v312, 2102212464
    %v325 = vsel %vm321, %v309, %v324
    %v326 = vsel %vm320, %v323, %v325
    %v327 = vsel %vm319, %v306, %v309
    %v328 = vsel %vm322, %v315, 920167782
    %v329 = vsel %vm321, %v312, %v328
    %v330 = vsel %vm320, %v327, %v329
    %v331 = vsel %vm319, %v309, %v312
    %v332 = vsel %vm322, %v318, 1326507024
    %v333 = vsel %vm321, %v315, %v332
    %v334 = vsel %vm320, %v331, %v333
    %v335 = vshll.u32 %v295, 8
    %v336 = vmul.u32.u64.compose %v335, %v334
    %v337 = vextract.low.u32 %v336
    %v338 = vextract.high.u32 %v336
    %v339 = vmul.u32.u64.compose %v335, %v330
    %v340 = vextract.low.u32 %v339
    %v341 = vextract.high.u32 %v339
    %v342 = vmul.u32 %v335, %v326
    %v343 = vadd.s32 %v338, %v340
    %vm344 = vc.u32 %v338, %v340
    %v345 = vadd.s32 %v341, 1
    %v346 = vsel %vm344, %v345, %v341
    %v347 = vadd.s32 %v342, %v346
    %v348 = vadd.s32 %v347, 536870912
    %v349 = vshrl.u32 %v348, 30
    %v350 = vshll.u32 %v349, 30
    %v351 = vsub.s32 %v347, %v350
    %vm352 = vcmp.lt.s32.totalorder %v351, 0
    %v353 = vsub.s32 0, %v351
    %v354 = vsel %vm352, %v353, %v351
    %v355 = vclz %v354
    %v356 = vsub.s32 %v355, 2
    %vm357 = vcmp.gt.s32.totalorder 0, %v356
    %v358 = vsel %vm357, 0, %v356
    %v359 = vsub.s32 32, %v358
    %v360 = vshll.u32 %v351, %v358
    %v361 = vshrl.u32 %v343, %v359
    %v362 = vor.u32 %v360, %v361
    %v363 = vsub.s32 4294967266, %v358
    %v364 = vadd.s32 %v363, 127
    %v365 = vshll.u32 %v364, 23
    %v366 = vor.u32 4788187, %v365
    %v367 = vand.u32 2147483647, %v366
    %v369 = vcvt.s32.f32 %v362
    %v370 = vmul.f32 %v369, %v367
    %v371 = vxor.u32 %v370, 2147483648
    %v372 = vsel %vm289, %v371, %v370
    %v373 = vsub.s32 4, %v349
    %v374 = vsel %vm289, %v373, %v349
    %v375 = vsel %vm288, %v269, %v372
    %v376 = vsel %vm288, 0, %v374
    %v377 = vcosq.f32.pop %v375
    %v378 = vsinq.f32.pop %v375
    %vm379 = vweird.f32 %v269
    %v380 = vadd.s32 %v376, 3
    %v381 = vand.u32 %v380, 3
    %vm382 = vcmp.lt.s32.totalorder %v381, 2
    %vm383 = vcmp.eq.s32.totalorder %v381, 0
    %v384 = vxor.u32 %v378, 2147483648
    %v385 = vsel %vm383, %v377, %v384
    %vm386 = vcmp.eq.s32.totalorder %v381, 2
    %v387 = vxor.u32 %v377, 2147483648
    %v388 = vsel %vm386, %v387, %v378
    %v389 = vsel %vm382, %v385, %v388
    %v390 = vsel %vm379, nan, %v389
    %v391 = vand.u32 2147483647, %v274
    %vm392 = vcmp.le.f32.partialorder %v391, 0.7853982
    %vm393 = vcmp.lt.s32.totalorder %v274, 0
    %v394 = vand.u32 %v274, 2139095040
    %v395 = vshrl.u32 %v394, 23
    %v396 = vsub.s32 %v395, 127
    %v397 = vand.u32 2147483647, %v274
    %v398 = vand.u32 %v397, 8388607
    %v399 = vor.u32 %v398, 8388608
    %v400 = vsub.s32 0, %v399
    %v401 = vadd.s32 %v396, 1
    %vm402 = vcmp.gt.s32.totalorder %v401, 0
    %v403 = vsel %vm402, %v401, 0
    %v404 = vshrl.u32 %v403, 5
    %v405 = vand.u32 %v403, 31
    %v406 = vsub.s32 32, %v405
    %v407 = vshrl.u32 683565275, %v406
    %v408 = vshll.u32 683565275, %v405
    %v409 = vshrl.u32 2475754826, %v406
    %v410 = vor.u32 %v408, %v409
    %v411 = vshll.u32 2475754826, %v405
    %v412 = vshrl.u32 2131351028, %v406
    %v413 = vor.u32 %v411, %v412
    %v414 = vshll.u32 2131351028, %v405
    %v415 = vshrl.u32 2102212464, %v406
    %v416 = vor.u32 %v414, %v415
    %v417 = vshll.u32 2102212464, %v405
    %v418 = vshrl.u32 920167782, %v406
    %v419 = vor.u32 %v417, %v418
    %v420 = vshll.u32 920167782, %v405
    %v421 = vshrl.u32 1326507024, %v406
    %v422 = vor.u32 %v420, %v421
    %vm423 = vcmp.lt.s32.totalorder %v404, 1
    %vm424 = vcmp.lt.s32.totalorder %v404, 2
    %vm425 = vcmp.lt.s32.totalorder %v404, 3
    %vm426 = vcmp.lt.s32.totalorder %v404, 4
    %v427 = vsel %vm423, %v407, %v410
    %v428 = vsel %vm426, %v416, 2102212464
    %v429 = vsel %vm425, %v413, %v428
    %v430 = vsel %vm424, %v427, %v429
    %v431 = vsel %vm423, %v410, %v413
    %v432 = vsel %vm426, %v419, 920167782
    %v433 = vsel %vm425, %v416, %v432
    %v434 = vsel %vm424, %v431, %v433
    %v435 = vsel %vm423, %v413, %v416
    %v436 = vsel %vm426, %v422, 1326507024
    %v437 = vsel %vm425, %v419, %v436
    %v438 = vsel %vm424, %v435, %v437
    %v439 = vshll.u32 %v399, 8
    %v440 = vmul.u32.u64.compose %v439, %v438
    %v441 = vextract.low.u32 %v440
    %v442 = vextract.high.u32 %v440
    %v443 = vmul.u32.u64.compose %v439, %v434
    %v444 = vextract.low.u32 %v443
    %v445 = vextract.high.u32 %v443
    %v446 = vmul.u32 %v439, %v430
    %v447 = vadd.s32 %v442, %v444
    %vm448 = vc.u32 %v442, %v444
    %v449 = vadd.s32 %v445, 1
    %v450 = vsel %vm448, %v449, %v445
    %v451 = vadd.s32 %v446, %v450
    %v452 = vadd.s32 %v451, 536870912
    %v453 = vshrl.u32 %v452, 30
    %v454 = vshll.u32 %v453, 30
    %v455 = vsub.s32 %v451, %v454
    %vm456 = vcmp.lt.s32.totalorder %v455, 0
    %v457 = vsub.s32 0, %v455
    %v458 = vsel %vm456, %v457, %v455
    %v459 = vclz %v458
    %v460 = vsub.s32 %v459, 2
    %vm461 = vcmp.gt.s32.totalorder 0, %v460
    %v462 = vsel %vm461, 0, %v460
    %v463 = vsub.s32 32, %v462
    %v464 = vshll.u32 %v455, %v462
    %v465 = vshrl.u32 %v447, %v463
    %v466 = vor.u32 %v464, %v465
    %v467 = vsub.s32 4294967266, %v462
    %v468 = vadd.s32 %v467, 127
    %v469 = vshll.u32 %v468, 23
    %v470 = vor.u32 4788187, %v469
    %v471 = vand.u32 2147483647, %v470
    %v473 = vcvt.s32.f32 %v466
    %v474 = vmul.f32 %v473, %v471
    %v475 = vxor.u32 %v474, 2147483648
    %v476 = vsel %vm393, %v475, %v474
    %v477 = vsub.s32 4, %v453
    %v478 = vsel %vm393, %v477, %v453
    %v479 = vsel %vm392, %v274, %v476
    %v480 = vsel %vm392, 0, %v478
    %v481 = vcosq.f32.pop %v479
    %v482 = vsinq.f32.pop %v479
    %vm483 = vweird.f32 %v274
    %v484 = vadd.s32 %v480, 3
    %v485 = vand.u32 %v484, 3
    %vm486 = vcmp.lt.s32.totalorder %v485, 2
    %vm487 = vcmp.eq.s32.totalorder %v485, 0
    %v488 = vxor.u32 %v482, 2147483648
    %v489 = vsel %vm487, %v481, %v488
    %vm490 = vcmp.eq.s32.totalorder %v485, 2
    %v491 = vxor.u32 %v481, 2147483648
    %v492 = vsel %vm490, %v491, %v482
    %v493 = vsel %vm486, %v489, %v492
    %v494 = vsel %vm483, nan, %v493
    %v495 = vand.u32 2147483647, %v279
    %vm496 = vcmp.le.f32.partialorder %v495, 0.7853982
    %vm497 = vcmp.lt.s32.totalorder %v279, 0
    %v498 = vand.u32 %v279, 2139095040
    %v499 = vshrl.u32 %v498, 23
    %v500 = vsub.s32 %v499, 127
    %v501 = vand.u32 2147483647, %v279
    %v502 = vand.u32 %v501, 8388607
    %v503 = vor.u32 %v502, 8388608
    %v504 = vsub.s32 0, %v503
    %v505 = vadd.s32 %v500, 1
    %vm506 = vcmp.gt.s32.totalorder %v505, 0
    %v507 = vsel %vm506, %v505, 0
    %v508 = vshrl.u32 %v507, 5
    %v509 = vand.u32 %v507, 31
    %v510 = vsub.s32 32, %v509
    %v511 = vshrl.u32 683565275, %v510
    %v512 = vshll.u32 683565275, %v509
    %v513 = vshrl.u32 2475754826, %v510
    %v514 = vor.u32 %v512, %v513
    %v515 = vshll.u32 2475754826, %v509
    %v516 = vshrl.u32 2131351028, %v510
    %v517 = vor.u32 %v515, %v516
    %v518 = vshll.u32 2131351028, %v509
    %v519 = vshrl.u32 2102212464, %v510
    %v520 = vor.u32 %v518, %v519
    %v521 = vshll.u32 2102212464, %v509
    %v522 = vshrl.u32 920167782, %v510
    %v523 = vor.u32 %v521, %v522
    %v524 = vshll.u32 920167782, %v509
    %v525 = vshrl.u32 1326507024, %v510
    %v526 = vor.u32 %v524, %v525
    %vm527 = vcmp.lt.s32.totalorder %v508, 1
    %vm528 = vcmp.lt.s32.totalorder %v508, 2
    %vm529 = vcmp.lt.s32.totalorder %v508, 3
    %vm530 = vcmp.lt.s32.totalorder %v508, 4
    %v531 = vsel %vm527, %v511, %v514
    %v532 = vsel %vm530, %v520, 2102212464
    %v533 = vsel %vm529, %v517, %v532
    %v534 = vsel %vm528, %v531, %v533
    %v535 = vsel %vm527, %v514, %v517
    %v536 = vsel %vm530, %v523, 920167782
    %v537 = vsel %vm529, %v520, %v536
    %v538 = vsel %vm528, %v535, %v537
    %v539 = vsel %vm527, %v517, %v520
    %v540 = vsel %vm530, %v526, 1326507024
    %v541 = vsel %vm529, %v523, %v540
    %v542 = vsel %vm528, %v539, %v541
    %v543 = vshll.u32 %v503, 8
    %v544 = vmul.u32.u64.compose %v543, %v542
    %v545 = vextract.low.u32 %v544
    %v546 = vextract.high.u32 %v544
    %v547 = vmul.u32.u64.compose %v543, %v538
    %v548 = vextract.low.u32 %v547
    %v549 = vextract.high.u32 %v547
    %v550 = vmul.u32 %v543, %v534
    %v551 = vadd.s32 %v546, %v548
    %vm552 = vc.u32 %v546, %v548
    %v553 = vadd.s32 %v549, 1
    %v554 = vsel %vm552, %v553, %v549
    %v555 = vadd.s32 %v550, %v554
    %v556 = vadd.s32 %v555, 536870912
    %v557 = vshrl.u32 %v556, 30
    %v558 = vshll.u32 %v557, 30
    %v559 = vsub.s32 %v555, %v558
    %vm560 = vcmp.lt.s32.totalorder %v559, 0
    %v561 = vsub.s32 0, %v559
    %v562 = vsel %vm560, %v561, %v559
    %v563 = vclz %v562
    %v564 = vsub.s32 %v563, 2
    %vm565 = vcmp.gt.s32.totalorder 0, %v564
    %v566 = vsel %vm565, 0, %v564
    %v567 = vsub.s32 32, %v566
    %v568 = vshll.u32 %v559, %v566
    %v569 = vshrl.u32 %v551, %v567
    %v570 = vor.u32 %v568, %v569
    %v571 = vsub.s32 4294967266, %v566
    %v572 = vadd.s32 %v571, 127
    %v573 = vshll.u32 %v572, 23
    %v574 = vor.u32 4788187, %v573
    %v575 = vand.u32 2147483647, %v574
    %v577 = vcvt.s32.f32 %v570
    %v578 = vmul.f32 %v577, %v575
    %v579 = vxor.u32 %v578, 2147483648
    %v580 = vsel %vm497, %v579, %v578
    %v581 = vsub.s32 4, %v557
    %v582 = vsel %vm497, %v581, %v557
    %v583 = vsel %vm496, %v279, %v580
    %v584 = vsel %vm496, 0, %v582
    %v585 = vcosq.f32.pop %v583
    %v586 = vsinq.f32.pop %v583
    %vm587 = vweird.f32 %v279
    %v588 = vadd.s32 %v584, 3
    %v589 = vand.u32 %v588, 3
    %vm590 = vcmp.lt.s32.totalorder %v589, 2
    %vm591 = vcmp.eq.s32.totalorder %v589, 0
    %v592 = vxor.u32 %v586, 2147483648
    %v593 = vsel %vm591, %v585, %v592
    %vm594 = vcmp.eq.s32.totalorder %v589, 2
    %v595 = vxor.u32 %v585, 2147483648
    %v596 = vsel %vm594, %v595, %v586
    %v597 = vsel %vm590, %v593, %v596
    %v598 = vsel %vm587, nan, %v597
    %v599 = vand.u32 2147483647, %v284
    %vm600 = vcmp.le.f32.partialorder %v599, 0.7853982
    %vm601 = vcmp.lt.s32.totalorder %v284, 0
    %v602 = vand.u32 %v284, 2139095040
    %v603 = vshrl.u32 %v602, 23
    %v604 = vsub.s32 %v603, 127
    %v605 = vand.u32 2147483647, %v284
    %v606 = vand.u32 %v605, 8388607
    %v607 = vor.u32 %v606, 8388608
    %v608 = vsub.s32 0, %v607
    %v609 = vadd.s32 %v604, 1
    %vm610 = vcmp.gt.s32.totalorder %v609, 0
    %v611 = vsel %vm610, %v609, 0
    %v612 = vshrl.u32 %v611, 5
    %v613 = vand.u32 %v611, 31
    %v614 = vsub.s32 32, %v613
    %v615 = vshrl.u32 683565275, %v614
    %v616 = vshll.u32 683565275, %v613
    %v617 = vshrl.u32 2475754826, %v614
    %v618 = vor.u32 %v616, %v617
    %v619 = vshll.u32 2475754826, %v613
    %v620 = vshrl.u32 2131351028, %v614
    %v621 = vor.u32 %v619, %v620
    %v622 = vshll.u32 2131351028, %v613
    %v623 = vshrl.u32 2102212464, %v614
    %v624 = vor.u32 %v622, %v623
    %v625 = vshll.u32 2102212464, %v613
    %v626 = vshrl.u32 920167782, %v614
    %v627 = vor.u32 %v625, %v626
    %v628 = vshll.u32 920167782, %v613
    %v629 = vshrl.u32 1326507024, %v614
    %v630 = vor.u32 %v628, %v629
    %vm631 = vcmp.lt.s32.totalorder %v612, 1
    %vm632 = vcmp.lt.s32.totalorder %v612, 2
    %vm633 = vcmp.lt.s32.totalorder %v612, 3
    %vm634 = vcmp.lt.s32.totalorder %v612, 4
    %v635 = vsel %vm631, %v615, %v618
    %v636 = vsel %vm634, %v624, 2102212464
    %v637 = vsel %vm633, %v621, %v636
    %v638 = vsel %vm632, %v635, %v637
    %v639 = vsel %vm631, %v618, %v621
    %v640 = vsel %vm634, %v627, 920167782
    %v641 = vsel %vm633, %v624, %v640
    %v642 = vsel %vm632, %v639, %v641
    %v643 = vsel %vm631, %v621, %v624
    %v644 = vsel %vm634, %v630, 1326507024
    %v645 = vsel %vm633, %v627, %v644
    %v646 = vsel %vm632, %v643, %v645
    %v647 = vshll.u32 %v607, 8
    %v648 = vmul.u32.u64.compose %v647, %v646
    %v649 = vextract.low.u32 %v648
    %v650 = vextract.high.u32 %v648
    %v651 = vmul.u32.u64.compose %v647, %v642
    %v652 = vextract.low.u32 %v651
    %v653 = vextract.high.u32 %v651
    %v654 = vmul.u32 %v647, %v638
    %v655 = vadd.s32 %v650, %v652
    %vm656 = vc.u32 %v650, %v652
    %v657 = vadd.s32 %v653, 1
    %v658 = vsel %vm656, %v657, %v653
    %v659 = vadd.s32 %v654, %v658
    %v660 = vadd.s32 %v659, 536870912
    %v661 = vshrl.u32 %v660, 30
    %v662 = vshll.u32 %v661, 30
    %v663 = vsub.s32 %v659, %v662
    %vm664 = vcmp.lt.s32.totalorder %v663, 0
    %v665 = vsub.s32 0, %v663
    %v666 = vsel %vm664, %v665, %v663
    %v667 = vclz %v666
    %v668 = vsub.s32 %v667, 2
    %vm669 = vcmp.gt.s32.totalorder 0, %v668
    %v670 = vsel %vm669, 0, %v668
    %v671 = vsub.s32 32, %v670
    %v672 = vshll.u32 %v663, %v670
    %v673 = vshrl.u32 %v655, %v671
    %v674 = vor.u32 %v672, %v673
    %v675 = vsub.s32 4294967266, %v670
    %v676 = vadd.s32 %v675, 127
    %v677 = vshll.u32 %v676, 23
    %v678 = vor.u32 4788187, %v677
    %v679 = vand.u32 2147483647, %v678
    %v681 = vcvt.s32.f32 %v674
    %v682 = vmul.f32 %v681, %v679
    %v683 = vxor.u32 %v682, 2147483648
    %v684 = vsel %vm601, %v683, %v682
    %v685 = vsub.s32 4, %v661
    %v686 = vsel %vm601, %v685, %v661
    %v687 = vsel %vm600, %v284, %v684
    %v688 = vsel %vm600, 0, %v686
    %v689 = vcosq.f32.pop %v687
    %v690 = vsinq.f32.pop %v687
    %vm691 = vweird.f32 %v284
    %v692 = vadd.s32 %v688, 3
    %v693 = vand.u32 %v692, 3
    %vm694 = vcmp.lt.s32.totalorder %v693, 2
    %vm695 = vcmp.eq.s32.totalorder %v693, 0
    %v696 = vxor.u32 %v690, 2147483648
    %v697 = vsel %vm695, %v689, %v696
    %vm698 = vcmp.eq.s32.totalorder %v693, 2
    %v699 = vxor.u32 %v689, 2147483648
    %v700 = vsel %vm698, %v699, %v690
    %v701 = vsel %vm694, %v697, %v700
    %v702 = vsel %vm691, nan, %v701
    %v703 = vld [vmem:[%s5] sm:$0xff]
    %v704 = vld [vmem:[%s5 + $0x8] sm:$0xff]
    %v705 = vld [vmem:[%s5 + $0x10] sm:$0xff]
    %v706 = vld [vmem:[%s5 + $0x18] sm:$0xff]
    %v708 = vsel %vm189, %v703, 0
    %v711 = vsel %vm189, %v704, 0
    %v714 = vsel %vm189, %v705, 0
    %v717 = vsel %vm189, %v706, 0
    %719 = vmatprep.subr.mxu0 0.0
    %720 = vmatpush1.msra.mxu0 %v390
    %721 = vmatprep.subr.mxu0 0.0
    %722 = vmatpush1.msra.mxu0 %v494
    %723 = vmatprep.subr.mxu0 0.0
    %724 = vmatpush1.msra.mxu0 %v598
    %725 = vmatprep.subr.mxu0 0.0
    %726 = vmatpush1.msra.mxu0 %v702
    %727 = vmatprep.subr.mxu0 0.0
    %728 = vmatpush1.msra.mxu0 0.0
    %729 = vmatprep.subr.mxu0 0.0
    %730 = vmatpush1.msra.mxu0 0.0
    %731 = vmatprep.subr.mxu0 0.0
    %732 = vmatpush1.msra.mxu0 0.0
    %733 = vmatprep.subr.mxu0 0.0
    %734 = vmatpush1.msra.mxu0 0.0
    %735 = vmatprep.subr.mxu0 0.0
    %736 = vmatpush1.msra.mxu0 0.0
    %737 = vmatprep.subr.mxu0 0.0
    %738 = vmatpush1.msra.mxu0 0.0
    %739 = vmatprep.subr.mxu0 0.0
    %740 = vmatpush1.msra.mxu0 0.0
    %741 = vmatprep.subr.mxu0 0.0
    %742 = vmatpush1.msra.mxu0 0.0
    %743 = vmatprep.subr.mxu0 0.0
    %744 = vmatpush1.msra.mxu0 0.0
    %745 = vmatprep.subr.mxu0 0.0
    %746 = vmatpush1.msra.mxu0 0.0
    %747 = vmatprep.subr.mxu0 0.0
    %748 = vmatpush1.msra.mxu0 0.0
    %749 = vmatprep.subr.mxu0 0.0
    %750 = vmatpush1.msra.mxu0 0.0
    %751 = vmatprep.subr.mxu0 0.0
    %752 = vmatpush1.msra.mxu0 0.0
    %753 = vmatprep.subr.mxu0 0.0
    %754 = vmatpush1.msra.mxu0 0.0
    %755 = vmatprep.subr.mxu0 0.0
    %756 = vmatpush1.msra.mxu0 0.0
    %757 = vmatprep.subr.mxu0 0.0
    %758 = vmatpush1.msra.mxu0 0.0
    %759 = vmatprep.subr.mxu0 0.0
    %760 = vmatpush1.msra.mxu0 0.0
    %761 = vmatprep.subr.mxu0 0.0
    %762 = vmatpush1.msra.mxu0 0.0
    %763 = vmatprep.subr.mxu0 0.0
    %764 = vmatpush1.msra.mxu0 0.0
    %765 = vmatprep.subr.mxu0 0.0
    %766 = vmatpush1.msra.mxu0 0.0
    %767 = vmatprep.subr.mxu0 0.0
    %768 = vmatpush1.msra.mxu0 0.0
    %769 = vmatprep.subr.mxu0 0.0
    %770 = vmatpush1.msra.mxu0 0.0
    %771 = vmatprep.subr.mxu0 0.0
    %772 = vmatpush1.msra.mxu0 0.0
    %773 = vmatprep.subr.mxu0 0.0
    %774 = vmatpush1.msra.mxu0 0.0
    %775 = vmatprep.subr.mxu0 0.0
    %776 = vmatpush1.msra.mxu0 0.0
    %777 = vmatprep.subr.mxu0 0.0
    %778 = vmatpush1.msra.mxu0 0.0
    %779 = vmatprep.subr.mxu0 0.0
    %780 = vmatpush1.msra.mxu0 0.0
    %781 = vmatprep.subr.mxu0 0.0
    %782 = vmatpush1.msra.mxu0 0.0
    %783 = vmatprep.mubr.f32.mxu0 0.0
    %784 = vmatmul.mubr.f32.gmra.mrb[0].mxu0 %v708
    %v785 = vpop.f32.mrb[0].mxu0
    %v786 = vadd.f32 0.0, %v785
    %v787 = vpop.f32.mrb[0].mxu0
    %788 = vmatprep.mubr.f32.mxu0 0.0
    %789 = vmatmul.mubr.f32.gmra.mrb[0].mxu0 %v711
    %v790 = vpop.f32.mrb[0].mxu0
    %v791 = vadd.f32 0.0, %v790
    %v792 = vpop.f32.mrb[0].mxu0
    %793 = vmatprep.mubr.f32.mxu0 0.0
    %794 = vmatmul.mubr.f32.gmra.mrb[0].mxu0 %v714
    %v795 = vpop.f32.mrb[0].mxu0
    %v796 = vadd.f32 0.0, %v795
    %v797 = vpop.f32.mrb[0].mxu0
    %798 = vmatprep.mubr.f32.mxu0 0.0
    %799 = vmatmul.mubr.f32.gmra.mrb[0].mxu0 %v717
    %v800 = vpop.f32.mrb[0].mxu0
    %v801 = vadd.f32 0.0, %v800
    %v802 = vpop.f32.mrb[0].mxu0
    %803 = vdwg.mxu0
    %v804 = vmul.f32 %v786, 0.5
    %v805 = vmul.f32 %v791, 0.5
    %v806 = vmul.f32 %v796, 0.5
    %v807 = vmul.f32 %v801, 0.5
    %v808 = vmul.f32 %v786, 0.70710677
    %v809 = vmul.f32 %v791, 0.70710677
    %v810 = vmul.f32 %v796, 0.70710677
    %v811 = vmul.f32 %v801, 0.70710677
    %v812 = verf.f32.pop %v808
    %v813 = verf.f32.pop %v809
    %v814 = verf.f32.pop %v810
    %v815 = verf.f32.pop %v811
    %v816 = vadd.f32 %v812, 1.0
    %v817 = vadd.f32 %v813, 1.0
    %v818 = vadd.f32 %v814, 1.0
    %v819 = vadd.f32 %v815, 1.0
    %v820 = vmul.f32 %v804, %v816
    %v821 = vmul.f32 %v805, %v817
    %v822 = vmul.f32 %v806, %v818
    %v823 = vmul.f32 %v807, %v819
    %v824 = vld [vmem:[%s6] sm:$0x3]
    %v826 = vsel %vm189, %v824, 0
    %828 = vmatprep.subr.mxu0 0.0
    %829 = vmatpush1.msra.mxu0 %v820
    %830 = vmatprep.subr.mxu0 0.0
    %831 = vmatpush1.msra.mxu0 %v821
    %832 = vmatprep.subr.mxu0 0.0
    %833 = vmatpush1.msra.mxu0 %v822
    %834 = vmatprep.subr.mxu0 0.0
    %835 = vmatpush1.msra.mxu0 %v823
    %836 = vmatprep.subr.mxu0 0.0
    %837 = vmatpush1.msra.mxu0 0.0
    %838 = vmatprep.subr.mxu0 0.0
    %839 = vmatpush1.msra.mxu0 0.0
    %840 = vmatprep.subr.mxu0 0.0
    %841 = vmatpush1.msra.mxu0 0.0
    %842 = vmatprep.subr.mxu0 0.0
    %843 = vmatpush1.msra.mxu0 0.0
    %844 = vmatprep.subr.mxu0 0.0
    %845 = vmatpush1.msra.mxu0 0.0
    %846 = vmatprep.subr.mxu0 0.0
    %847 = vmatpush1.msra.mxu0 0.0
    %848 = vmatprep.subr.mxu0 0.0
    %849 = vmatpush1.msra.mxu0 0.0
    %850 = vmatprep.subr.mxu0 0.0
    %851 = vmatpush1.msra.mxu0 0.0
    %852 = vmatprep.subr.mxu0 0.0
    %853 = vmatpush1.msra.mxu0 0.0
    %854 = vmatprep.subr.mxu0 0.0
    %855 = vmatpush1.msra.mxu0 0.0
    %856 = vmatprep.subr.mxu0 0.0
    %857 = vmatpush1.msra.mxu0 0.0
    %858 = vmatprep.subr.mxu0 0.0
    %859 = vmatpush1.msra.mxu0 0.0
    %860 = vmatprep.subr.mxu0 0.0
    %861 = vmatpush1.msra.mxu0 0.0
    %862 = vmatprep.subr.mxu0 0.0
    %863 = vmatpush1.msra.mxu0 0.0
    %864 = vmatprep.subr.mxu0 0.0
    %865 = vmatpush1.msra.mxu0 0.0
    %866 = vmatprep.subr.mxu0 0.0
    %867 = vmatpush1.msra.mxu0 0.0
    %868 = vmatprep.subr.mxu0 0.0
    %869 = vmatpush1.msra.mxu0 0.0
    %870 = vmatprep.subr.mxu0 0.0
    %871 = vmatpush1.msra.mxu0 0.0
    %872 = vmatprep.subr.mxu0 0.0
    %873 = vmatpush1.msra.mxu0 0.0
    %874 = vmatprep.subr.mxu0 0.0
    %875 = vmatpush1.msra.mxu0 0.0
    %876 = vmatprep.subr.mxu0 0.0
    %877 = vmatpush1.msra.mxu0 0.0
    %878 = vmatprep.subr.mxu0 0.0
    %879 = vmatpush1.msra.mxu0 0.0
    %880 = vmatprep.subr.mxu0 0.0
    %881 = vmatpush1.msra.mxu0 0.0
    %882 = vmatprep.subr.mxu0 0.0
    %883 = vmatpush1.msra.mxu0 0.0
    %884 = vmatprep.subr.mxu0 0.0
    %885 = vmatpush1.msra.mxu0 0.0
    %886 = vmatprep.subr.mxu0 0.0
    %887 = vmatpush1.msra.mxu0 0.0
    %888 = vmatprep.subr.mxu0 0.0
    %889 = vmatpush1.msra.mxu0 0.0
    %890 = vmatprep.subr.mxu0 0.0
    %891 = vmatpush1.msra.mxu0 0.0
    %892 = vmatprep.mubr.f32.mxu0 0.0
    %893 = vmatmul.mubr.f32.gmra.mrb[0].mxu0 %v826
    %v894 = vpop.f32.mrb[0].mxu0
    %v895 = vadd.f32 0.0, %v894
    %v896 = vpop.f32.mrb[0].mxu0
    %897 = vdwg.mxu0
    %vm898 = vcmask 58368
    %899 = vst.msk [vmem:[#allocation2] sm:$0x3] %vm898, %v895
    // Predicated region
    $region30: #{tpu_custom_call.1} parent=1 // pred_check
      _
    $region31: #{tpu_custom_call.1} parent=1 // pred_check_branch
      %901 = sbr.rel (0) target = $region33
    $region32: #{tpu_custom_call.1} parent=1 // pred_region
      %s903 = ssub.s32 32, 32
      %904 = vsyncadd [#allocation3], %s903
      %s906 = sshll.u32 [#allocation2], 4
      %s907 = int_to_ptr.vmem [resolvable:$true] %s906
      %909 = dma.vmem_to_hbm [thread:$0]  %s907, 32, %s7, [#allocation3]
    $region33: #{tpu_custom_call.1} parent=1 // pred_fallthru
      _
    // Predicated region
    $region34: #{tpu_custom_call.1} parent=1 // pred_check
      _
    $region35: #{tpu_custom_call.1} parent=1 // pred_check_branch
      %911 = sbr.rel (0) target = $region37
    $region36: #{tpu_custom_call.1} parent=1 // pred_region
      %912 = dma.done [#allocation3], 32
    $region37: #{tpu_custom_call.1} parent=1 // pred_fallthru
      _
    %913 = vsyncpa [#allocation3], 1

</llo_original>
